<compile_context>
chip_gen: v6e
topology: v6e:2x2x1
jax: 0.10.0
libtpu: 0.0.40
codegen_flags: <defaults>
</compile_context>

<pallas_src>
import numpy as np
import jax
import jax.numpy as jnp
from jax.experimental import pallas as pl
from jax.experimental.pallas import tpu as pltpu

_HIGHEST = jax.lax.Precision.HIGHEST


# ----------------------------- Pallas kernel --------------------------------

def _fused_chessnet_kernel(x_ref, w1_ref, b1_ref, w2_ref, b2_ref,
                           w3_ref, b3_ref, o_ref):
    # x: (TB, 192) NCHW-flat input rows.
    y1 = jnp.dot(x_ref[...], w1_ref[...], preferred_element_type=jnp.float32)
    y1 = jnp.maximum(y1 + b1_ref[...], 0.0)           # (TB, 288) conv1 + relu
    y2 = jnp.dot(y1, w2_ref[...], preferred_element_type=jnp.float32)
    y2 = jnp.maximum(y2 + b2_ref[...], 0.0)           # (TB, 256) conv2 + relu
    # fc1 (256 -> 1): VPU multiply + lane reduction, not an N=1 MXU matmul.
    out = jnp.sum(y2 * w3_ref[...], axis=-1, keepdims=True) + b3_ref[...]
    o_ref[...] = jnp.maximum(out, 0.0)                # (TB, 1)


def chess_net2_forward(x_nchw, prepared, *, block_b=512):
    """Fused ChessNet2 forward. x_nchw: (B, 3, 8, 8) float32 -> (B, 1)."""
    B, C, H, W = x_nchw.shape
    in_dim = prepared["w1"].shape[0]
    assert C * H * W == in_dim, "expected (B, 3, 8, 8) input for selection=1"
    x_flat = x_nchw.reshape(B, in_dim).astype(jnp.float32)  # free NCHW flatten

    tb = max(1, min(block_b, B))          # batch tile; sized well under the
    grid = (pl.cdiv(B, tb),)              # v7x 32 MiB scoped-VMEM default
    const = lambda i: (0, 0)

    return pl.pallas_call(
        _fused_chessnet_kernel,
        out_shape=jax.ShapeDtypeStruct((B, 1), jnp.float32),
        grid=grid,
        in_specs=[
            pl.BlockSpec((tb, in_dim), lambda i: (i, 0)),
            pl.BlockSpec(prepared["w1"].shape, const),
            pl.BlockSpec(prepared["b1"].shape, const),
            pl.BlockSpec(prepared["w2"].shape, const),
            pl.BlockSpec(prepared["b2"].shape, const),
            pl.BlockSpec(prepared["w3"].shape, const),
            pl.BlockSpec(prepared["b3"].shape, const),
        ],
        out_specs=pl.BlockSpec((tb, 1), lambda i: (i, 0)),
        compiler_params=pltpu.CompilerParams(
            dimension_semantics=("parallel",)),
    )(x_flat, prepared["w1"], prepared["b1"], prepared["w2"],
      prepared["b2"], prepared["w3"], prepared["b3"])


# --------------------- one-time parameter preparation ------------------------

def _shift_matrix(in_size, out_size, k):
    # S[i, o, t] = 1.0 iff i == o + t   (valid-convolution index selector).
    i = np.arange(in_size)[:, None, None]
    o = np.arange(out_size)[None, :, None]
    t = np.arange(k)[None, None, :]
    return jnp.asarray((i == o + t).astype(np.float32))


def prepare_params(params, selection=1):
    """One-time lowering of PyTorch-layout params to fused-kernel operands."""
    assert int(selection) == 1, "only selection=1 (8x8 board, 256 features)"
    K = 3
    H0 = W0 = 8                        # input spatial
    H1, W1 = H0 - K + 1, W0 - K + 1    # 6, 6
    H2, W2 = H1 - K + 1, W1 - K + 1    # 4, 4
    C0, C1, C2 = 3, 8, 16

    # conv1 Toeplitz: rows = NCHW-flat input (ci, ih, iw) = 192,
    #                 cols = NHWC-flat y1    (oh, ow, co)  = 288.
    a1 = _shift_matrix(H0, H1, K)      # (8, 6, 3) [ih, oh, ki]
    b1 = _shift_matrix(W0, W1, K)      # (8, 6, 3) [iw, ow, kj]
    t1 = jnp.einsum("hoa,wpb,cdab->dhwopc", a1, b1,
                    params["conv1_w"].astype(jnp.float32),
                    precision=_HIGHEST)             # (ci, ih, iw, oh, ow, co)
    w1m = t1.reshape(C0 * H0 * W0, H1 * W1 * C1)    # (192, 288)
    b1m = jnp.tile(params["conv1_b"], H1 * W1).reshape(1, H1 * W1 * C1)

    # conv2 Toeplitz: rows = NHWC-flat y1 (ih, iw, ci) = 288,
    #                 cols = NCHW-flat y2 (co, oh, ow) = 256  -- exactly
    #                 torch's .view(-1, 256) order (flatten folded into W).
    a2 = _shift_matrix(H1, H2, K)      # (6, 4, 3)
    b2 = _shift_matrix(W1, W2, K)      # (6, 4, 3)
    t2 = jnp.einsum("hoa,wpb,cdab->hwdcop", a2, b2,
                    params["conv2_w"].astype(jnp.float32),
                    precision=_HIGHEST)             # (ih, iw, ci, co, oh, ow)
    w2m = t2.reshape(H1 * W1 * C1, C2 * H2 * W2)    # (288, 256)
    b2m = jnp.repeat(params["conv2_b"], H2 * W2).reshape(1, C2 * H2 * W2)

    w3m = params["fc1_w"].reshape(1, C2 * H2 * W2).astype(jnp.float32)
    b3m = params["fc1_b"].reshape(1, 1).astype(jnp.float32)

    return {"w1": w1m.astype(jnp.float32), "b1": b1m.astype(jnp.float32),
            "w2": w2m.astype(jnp.float32), "b2": b2m.astype(jnp.float32),
            "w3": w3m, "b3": b3m}


def init_params(key):
    """Deterministic synthetic parameters with PyTorch layer shapes."""
    ks = jax.random.split(key, 6)
    scale = 0.1
    return {
        "conv1_w": jax.random.normal(ks[0], (8, 3, 3, 3), jnp.float32) * scale,
        "conv1_b": jax.random.normal(ks[1], (8,), jnp.float32) * scale,
        "conv2_w": jax.random.normal(ks[2], (16, 8, 3, 3), jnp.float32) * scale,
        "conv2_b": jax.random.normal(ks[3], (16,), jnp.float32) * scale,
        "fc1_w":   jax.random.normal(ks[4], (1, 256), jnp.float32) * scale,
        "fc1_b":   jax.random.normal(ks[5], (1,), jnp.float32) * scale,
    }


# ------------------------- pure-JAX reference check --------------------------

def _reference_forward(x_nchw, params):
    """Plain-JAX mirror of the PyTorch module."""
    dn = ("NCHW", "OIHW", "NCHW")
    y = jax.lax.conv_general_dilated(x_nchw, params["conv1_w"], (1, 1), "VALID",
                                     dimension_numbers=dn, precision=_HIGHEST)
    y = jnp.maximum(y + params["conv1_b"][None, :, None, None], 0.0)
    y = jax.lax.conv_general_dilated(y, params["conv2_w"], (1, 1), "VALID",
                                     dimension_numbers=dn, precision=_HIGHEST)
    y = jnp.maximum(y + params["conv2_b"][None, :, None, None], 0.0)
    y = y.reshape(y.shape[0], -1)                      # torch .view(-1, 256)
    y = jnp.dot(y, params["fc1_w"].T, precision=_HIGHEST) + params["fc1_b"]
    return jnp.maximum(y, 0.0)


if __name__ == "__main__":
    key = jax.random.PRNGKey(0)
    k_params, k_x = jax.random.split(key)
    params = init_params(k_params)
    prepared = prepare_params(params, selection=1)     # hoisted, one-time

    # selection=1 => 3-plane 8x8 board.
    x = jax.random.normal(k_x, (2, 3, 8, 8), jnp.float32)

    out = chess_net2_forward(x, prepared)
    jax.block_until_ready(out)
    assert out.shape == (2, 1)

    ref = _reference_forward(x, params)
    assert jnp.allclose(out, ref, rtol=2e-2, atol=2e-2), (out, ref)
    print("KERNEL_OK")
</pallas_src>

<mosaic_0001>
module attributes {stable_mosaic.version = 11 : i64} {
  func.func @_fused_chessnet_kernel(%arg0: i32, %arg1: memref<2x192xf32, #tpu.memory_space<vmem>>, %arg2: memref<192x288xf32, #tpu.memory_space<vmem>>, %arg3: memref<1x288xf32, #tpu.memory_space<vmem>>, %arg4: memref<288x256xf32, #tpu.memory_space<vmem>>, %arg5: memref<1x256xf32, #tpu.memory_space<vmem>>, %arg6: memref<1x256xf32, #tpu.memory_space<vmem>>, %arg7: memref<1x1xf32, #tpu.memory_space<vmem>>, %arg8: memref<2x1xf32, #tpu.memory_space<vmem>>) attributes {dimension_semantics = [#tpu.dimension_semantics<parallel>], iteration_bounds = array<i64: 1>, scalar_prefetch = 0 : i64, scratch_operands = 0 : i64, tpu.core_type = #tpu.core_type<tc>, window_params = [{transform_indices = @transform_0, window_bounds = array<i64: 2, 192>}, {pipeline_mode = #tpu.pipeline_mode<synchronous>, transform_indices = @transform_1, window_bounds = array<i64: 192, 288>}, {pipeline_mode = #tpu.pipeline_mode<synchronous>, transform_indices = @transform_2, window_bounds = array<i64: 1, 288>}, {pipeline_mode = #tpu.pipeline_mode<synchronous>, transform_indices = @transform_3, window_bounds = array<i64: 288, 256>}, {pipeline_mode = #tpu.pipeline_mode<synchronous>, transform_indices = @transform_4, window_bounds = array<i64: 1, 256>}, {pipeline_mode = #tpu.pipeline_mode<synchronous>, transform_indices = @transform_5, window_bounds = array<i64: 1, 256>}, {pipeline_mode = #tpu.pipeline_mode<synchronous>, transform_indices = @transform_6, window_bounds = array<i64: 1, 1>}, {transform_indices = @transform_7, window_bounds = array<i64: 2, 1>}]} {
    %c0 = arith.constant 0 : index
    %c0_0 = arith.constant 0 : index
    %0 = vector.load %arg1[%c0, %c0_0] : memref<2x192xf32, #tpu.memory_space<vmem>>, vector<2x192xf32>
    %c0_1 = arith.constant 0 : index
    %c0_2 = arith.constant 0 : index
    %1 = vector.load %arg2[%c0_1, %c0_2] : memref<192x288xf32, #tpu.memory_space<vmem>>, vector<192x288xf32>
    %cst = arith.constant dense<0.000000e+00> : vector<2x288xf32>
    %2 = tpu.matmul %0, %1, %cst {dimension_numbers = #tpu.dot_dimension_numbers<[1], [0], [0], [1], [0, 0, 1, 1], [], []>} : vector<2x192xf32>, vector<192x288xf32>, vector<2x288xf32> -> vector<2x288xf32>
    %c0_3 = arith.constant 0 : index
    %c0_4 = arith.constant 0 : index
    %3 = vector.load %arg3[%c0_3, %c0_4] : memref<1x288xf32, #tpu.memory_space<vmem>>, vector<1x288xf32>
    %4 = vector.broadcast %3 : vector<1x288xf32> to vector<2x288xf32>
    %5 = arith.addf %2, %4 : vector<2x288xf32>
    %cst_5 = arith.constant 0.000000e+00 : f32
    %6 = vector.broadcast %cst_5 : f32 to vector<2x288xf32>
    %7 = arith.maximumf %5, %6 : vector<2x288xf32>
    %c0_6 = arith.constant 0 : index
    %c0_7 = arith.constant 0 : index
    %8 = vector.load %arg4[%c0_6, %c0_7] : memref<288x256xf32, #tpu.memory_space<vmem>>, vector<288x256xf32>
    %cst_8 = arith.constant dense<0.000000e+00> : vector<2x256xf32>
    %9 = tpu.matmul %7, %8, %cst_8 {dimension_numbers = #tpu.dot_dimension_numbers<[1], [0], [0], [1], [0, 0, 1, 1], [], []>} : vector<2x288xf32>, vector<288x256xf32>, vector<2x256xf32> -> vector<2x256xf32>
    %c0_9 = arith.constant 0 : index
    %c0_10 = arith.constant 0 : index
    %10 = vector.load %arg5[%c0_9, %c0_10] : memref<1x256xf32, #tpu.memory_space<vmem>>, vector<1x256xf32>
    %11 = vector.broadcast %10 : vector<1x256xf32> to vector<2x256xf32>
    %12 = arith.addf %9, %11 : vector<2x256xf32>
    %cst_11 = arith.constant 0.000000e+00 : f32
    %13 = vector.broadcast %cst_11 : f32 to vector<2x256xf32>
    %14 = arith.maximumf %12, %13 : vector<2x256xf32>
    %c0_12 = arith.constant 0 : index
    %c0_13 = arith.constant 0 : index
    %15 = vector.load %arg6[%c0_12, %c0_13] : memref<1x256xf32, #tpu.memory_space<vmem>>, vector<1x256xf32>
    %16 = vector.broadcast %15 : vector<1x256xf32> to vector<2x256xf32>
    %17 = arith.mulf %14, %16 : vector<2x256xf32>
    %cst_14 = arith.constant dense<0.000000e+00> : vector<2xf32>
    %18 = vector.multi_reduction <add>, %17, %cst_14 [1] : vector<2x256xf32> to vector<2xf32>
    %19 = vector.shape_cast %18 : vector<2xf32> to vector<2x1xf32>
    %c0_15 = arith.constant 0 : index
    %c0_16 = arith.constant 0 : index
    %20 = vector.load %arg7[%c0_15, %c0_16] : memref<1x1xf32, #tpu.memory_space<vmem>>, vector<1x1xf32>
    %21 = vector.broadcast %20 : vector<1x1xf32> to vector<2x1xf32>
    %22 = arith.addf %19, %21 : vector<2x1xf32>
    %cst_17 = arith.constant 0.000000e+00 : f32
    %23 = vector.broadcast %cst_17 : f32 to vector<2x1xf32>
    %24 = arith.maximumf %22, %23 : vector<2x1xf32>
    %c0_18 = arith.constant 0 : index
    %c0_19 = arith.constant 0 : index
    %25 = vector.load %arg8[%c0_18, %c0_19] : memref<2x1xf32, #tpu.memory_space<vmem>>, vector<2x1xf32>
    tpu.vector_store %arg8[%c0_18, %c0_19], %24 {strides = array<i32>} : memref<2x1xf32, #tpu.memory_space<vmem>>, vector<2x1xf32>,
    return
  }
  func.func @transform_0(%arg0: i32) -> (i32, i32) {
    %c0_i32 = arith.constant 0 : i32
    %c0_i32_0 = arith.constant 0 : i32
    return %arg0, %c0_i32 : i32, i32
  }
  func.func @transform_1(%arg0: i32) -> (i32, i32) {
    %c0_i32 = arith.constant 0 : i32
    %c0_i32_0 = arith.constant 0 : i32
    %c0_i32_1 = arith.constant 0 : i32
    return %c0_i32, %c0_i32_0 : i32, i32
  }
  func.func @transform_2(%arg0: i32) -> (i32, i32) {
    %c0_i32 = arith.constant 0 : i32
    %c0_i32_0 = arith.constant 0 : i32
    %c0_i32_1 = arith.constant 0 : i32
    return %c0_i32, %c0_i32_0 : i32, i32
  }
  func.func @transform_3(%arg0: i32) -> (i32, i32) {
    %c0_i32 = arith.constant 0 : i32
    %c0_i32_0 = arith.constant 0 : i32
    %c0_i32_1 = arith.constant 0 : i32
    return %c0_i32, %c0_i32_0 : i32, i32
  }
  func.func @transform_4(%arg0: i32) -> (i32, i32) {
    %c0_i32 = arith.constant 0 : i32
    %c0_i32_0 = arith.constant 0 : i32
    %c0_i32_1 = arith.constant 0 : i32
    return %c0_i32, %c0_i32_0 : i32, i32
  }
  func.func @transform_5(%arg0: i32) -> (i32, i32) {
    %c0_i32 = arith.constant 0 : i32
    %c0_i32_0 = arith.constant 0 : i32
    %c0_i32_1 = arith.constant 0 : i32
    return %c0_i32, %c0_i32_0 : i32, i32
  }
  func.func @transform_6(%arg0: i32) -> (i32, i32) {
    %c0_i32 = arith.constant 0 : i32
    %c0_i32_0 = arith.constant 0 : i32
    %c0_i32_1 = arith.constant 0 : i32
    return %c0_i32, %c0_i32_0 : i32, i32
  }
  func.func @transform_7(%arg0: i32) -> (i32, i32) {
    %c0_i32 = arith.constant 0 : i32
    %c0_i32_0 = arith.constant 0 : i32
    return %arg0, %c0_i32 : i32, i32
  }
}

</mosaic_0001>

<llo_original>
// kernel: tpu_custom_call.1
$region0: #{tpu_custom_call.1}
  #allocation0 [shape = 'u32[]', space=smem, size = 0x4, offset = 0x4, fixed_abs, tag = 'smem constant byte address 0x4 - core index']
  #allocation1 [shape = 'u32[144,128]{1,0:T(1,128)}', space=vmem, size = 0x12000, scoped, tag = 'internal scratch']
  #allocation2 [shape = 'f32[1,1]{1,0:T(1,128)S(1)}', space=vmem, size = 0x200, scoped, tag = 'scoped memory for tpu_custom_call.1']
  %s0 = inlined_call_operand.hbm [shape: f32[2,192], index: 0, kind: input, shape index: {}]
  %s1 = inlined_call_operand.hbm [shape: f32[192,288], index: 1, kind: input, shape index: {}]
  %s2 = inlined_call_operand.vmem [shape: f32[1,288], index: 2, kind: input, shape index: {}]
  %s3 = inlined_call_operand.hbm [shape: f32[288,256], index: 3, kind: input, shape index: {}]
  %s4 = inlined_call_operand.vmem [shape: f32[1,256], index: 4, kind: input, shape index: {}]
  %s5 = inlined_call_operand.vmem [shape: f32[1,256], index: 5, kind: input, shape index: {}]
  %s6 = inlined_call_operand.<no memory space> [shape: f32[1,1], index: 6, kind: input, shape index: {}]
  %s7 = inlined_call_operand.vmem [shape: f32[2,1], index: 7, kind: output, shape index: {}]
  %s8 = sld [smem:[#allocation0]]
  $region50: #{tpu_custom_call.1} parent=0
    _
  %s10 = ssub.s32 1, %s8
  %s11 = scalar_select 0, %s10, %s8
  %v12 = vstv %s6
  %13 = vst [vmem:[#allocation2] sm:$0x1] %v12
  $region1: #{tpu_custom_call.1} parent=0
    #allocation3 [shape = 'u8[2048]{0}', space=vmem, size = 0x800, scoped, tag = 'input window, operand 0, single buffered']
    #allocation4 [shape = 's32[1]{0}', space=sflag, size = 0x4, scoped, tag = 'scoped memory for tpu_custom_call.1']
    #allocation5 [shape = 'u8[294912]{0}', space=vmem, size = 0x48000, scoped, tag = 'input window, operand 1, single buffered']
    #allocation6 [shape = 's32[1]{0}', space=sflag, size = 0x4, scoped, tag = 'scoped memory for tpu_custom_call.1']
    #allocation7 [shape = 'u8[294912]{0}', space=vmem, size = 0x48000, scoped, tag = 'input window, operand 3, single buffered']
    %14 = vsyncpa [#allocation4], 0
    %15 = vsyncpa [#allocation6], 0
    // Predicated region
    $region2: #{tpu_custom_call.1} parent=1 // pred_check
      _
    $region3: #{tpu_custom_call.1} parent=1 // pred_check_branch
      %17 = sbr.rel (0) target = $region5
    $region4: #{tpu_custom_call.1} parent=1 // pred_region
      %s19 = ssub.s32 64, 64
      %20 = vsyncadd [#allocation4], %s19
      %s22 = sshll.u32 [#allocation3], 4
      %s23 = int_to_ptr.vmem [resolvable:$true] %s22
      %25 = dma.hbm_to_vmem [thread:$0]  %s0, 64, %s23, [#allocation4]
    $region5: #{tpu_custom_call.1} parent=1 // pred_fallthru
      _
    // Predicated region
    $region6: #{tpu_custom_call.1} parent=1 // pred_check
      _
    $region7: #{tpu_custom_call.1} parent=1 // pred_check_branch
      %27 = sbr.rel (0) target = $region9
    $region8: #{tpu_custom_call.1} parent=1 // pred_region
      %s29 = ssub.s32 9216, 9216
      %30 = vsyncadd [#allocation6], %s29
      %s31 = sshll.u32 [#allocation5], 4
      %s32 = int_to_ptr.vmem [resolvable:$true] %s31
      %37 = dma.hbm_to_vmem [thread:$0]  %s1, 9216, %s32, [#allocation6], 384, 384, 24
    $region9: #{tpu_custom_call.1} parent=1 // pred_fallthru
      _
    // Predicated region
    $region10: #{tpu_custom_call.1} parent=1 // pred_check
      _
    $region11: #{tpu_custom_call.1} parent=1 // pred_check_branch
      %39 = sbr.rel (0) target = $region13
    $region12: #{tpu_custom_call.1} parent=1 // pred_region
      _
    $region13: #{tpu_custom_call.1} parent=1 // pred_fallthru
      _
    // Predicated region
    $region14: #{tpu_custom_call.1} parent=1 // pred_check
      _
    $region15: #{tpu_custom_call.1} parent=1 // pred_check_branch
      %41 = sbr.rel (0) target = $region17
    $region16: #{tpu_custom_call.1} parent=1 // pred_region
      %s43 = ssub.s32 9216, 9216
      %44 = vsyncadd [#allocation6], %s43
      %s45 = sshll.u32 [#allocation7], 4
      %s46 = int_to_ptr.vmem [resolvable:$true] %s45
      %51 = dma.hbm_to_vmem [thread:$0]  %s3, 9216, %s46, [#allocation6], 256, 256, 16
    $region17: #{tpu_custom_call.1} parent=1 // pred_fallthru
      _
    // Predicated region
    $region18: #{tpu_custom_call.1} parent=1 // pred_check
      _
    $region19: #{tpu_custom_call.1} parent=1 // pred_check_branch
      %53 = sbr.rel (0) target = $region21
    $region20: #{tpu_custom_call.1} parent=1 // pred_region
      _
    $region21: #{tpu_custom_call.1} parent=1 // pred_fallthru
      _
    // Predicated region
    $region22: #{tpu_custom_call.1} parent=1 // pred_check
      _
    $region23: #{tpu_custom_call.1} parent=1 // pred_check_branch
      %55 = sbr.rel (0) target = $region25
    $region24: #{tpu_custom_call.1} parent=1 // pred_region
      _
    $region25: #{tpu_custom_call.1} parent=1 // pred_fallthru
      _
    // Predicated region
    $region26: #{tpu_custom_call.1} parent=1 // pred_check
      _
    $region27: #{tpu_custom_call.1} parent=1 // pred_check_branch
      %57 = sbr.rel (0) target = $region29
    $region28: #{tpu_custom_call.1} parent=1 // pred_region
      _
    $region29: #{tpu_custom_call.1} parent=1 // pred_fallthru
      _
    // Predicated region
    $region30: #{tpu_custom_call.1} parent=1 // pred_check
      _
    $region31: #{tpu_custom_call.1} parent=1 // pred_check_branch
      %59 = sbr.rel (0) target = $region33
    $region32: #{tpu_custom_call.1} parent=1 // pred_region
      %60 = dma.done [#allocation4], 64
    $region33: #{tpu_custom_call.1} parent=1 // pred_fallthru
      _
    // Predicated region
    $region34: #{tpu_custom_call.1} parent=1 // pred_check
      _
    $region35: #{tpu_custom_call.1} parent=1 // pred_check_branch
      %62 = sbr.rel (0) target = $region37
    $region36: #{tpu_custom_call.1} parent=1 // pred_region
      %63 = dma.done [#allocation6], 9216
    $region37: #{tpu_custom_call.1} parent=1 // pred_fallthru
      _
    // Predicated region
    $region38: #{tpu_custom_call.1} parent=1 // pred_check
      _
    $region39: #{tpu_custom_call.1} parent=1 // pred_check_branch
      %65 = sbr.rel (0) target = $region41
    $region40: #{tpu_custom_call.1} parent=1 // pred_region
      %66 = dma.done [#allocation6], 9216
    $region41: #{tpu_custom_call.1} parent=1 // pred_fallthru
      _
    %v67 = vld [vmem:[#allocation3] sm:$0xf]
    %v68 = vld [vmem:[#allocation5] sm:$0xff]
    %v69 = vld [vmem:[#allocation5 + $0x8] sm:$0xff]
    %v70 = vld [vmem:[#allocation5 + $0x10] sm:$0xff]
    %v71 = vld [vmem:[#allocation5 + $0x18] sm:$0xff]
    %v72 = vld [vmem:[#allocation5 + $0x20] sm:$0xff]
    %v73 = vld [vmem:[#allocation5 + $0x28] sm:$0xff]
    %v74 = vld [vmem:[#allocation5 + $0x30] sm:$0xff]
    %v75 = vld [vmem:[#allocation5 + $0x38] sm:$0xff]
    %v76 = vld [vmem:[#allocation5 + $0x40] sm:$0xff]
    %v77 = vld [vmem:[#allocation5 + $0x48] sm:$0xff]
    %v78 = vld [vmem:[#allocation5 + $0x50] sm:$0xff]
    %v79 = vld [vmem:[#allocation5 + $0x58] sm:$0xff]
    %v80 = vld [vmem:[#allocation5 + $0x60] sm:$0xff]
    %v81 = vld [vmem:[#allocation5 + $0x68] sm:$0xff]
    %v82 = vld [vmem:[#allocation5 + $0x70] sm:$0xff]
    %v83 = vld [vmem:[#allocation5 + $0x78] sm:$0xff]
    %v84 = vld [vmem:[#allocation5 + $0x80] sm:$0xff]
    %v85 = vld [vmem:[#allocation5 + $0x88] sm:$0xff]
    %v86 = vld [vmem:[#allocation5 + $0x90] sm:$0xff]
    %v87 = vld [vmem:[#allocation5 + $0x98] sm:$0xff]
    %v88 = vld [vmem:[#allocation5 + $0xa0] sm:$0xff]
    %v89 = vld [vmem:[#allocation5 + $0xa8] sm:$0xff]
    %v90 = vld [vmem:[#allocation5 + $0xb0] sm:$0xff]
    %v91 = vld [vmem:[#allocation5 + $0xb8] sm:$0xff]
    %v92 = vld [vmem:[#allocation5 + $0xc0] sm:$0xff]
    %v93 = vld [vmem:[#allocation5 + $0xc8] sm:$0xff]
    %v94 = vld [vmem:[#allocation5 + $0xd0] sm:$0xff]
    %v95 = vld [vmem:[#allocation5 + $0xd8] sm:$0xff]
    %v96 = vld [vmem:[#allocation5 + $0xe0] sm:$0xff]
    %v97 = vld [vmem:[#allocation5 + $0xe8] sm:$0xff]
    %v98 = vld [vmem:[#allocation5 + $0xf0] sm:$0xff]
    %v99 = vld [vmem:[#allocation5 + $0xf8] sm:$0xff]
    %v100 = vld [vmem:[#allocation5 + $0x100] sm:$0xff]
    %v101 = vld [vmem:[#allocation5 + $0x108] sm:$0xff]
    %v102 = vld [vmem:[#allocation5 + $0x110] sm:$0xff]
    %v103 = vld [vmem:[#allocation5 + $0x118] sm:$0xff]
    %v104 = vld [vmem:[#allocation5 + $0x120] sm:$0xff]
    %v105 = vld [vmem:[#allocation5 + $0x128] sm:$0xff]
    %v106 = vld [vmem:[#allocation5 + $0x130] sm:$0xff]
    %v107 = vld [vmem:[#allocation5 + $0x138] sm:$0xff]
    %v108 = vld [vmem:[#allocation5 + $0x140] sm:$0xff]
    %v109 = vld [vmem:[#allocation5 + $0x148] sm:$0xff]
    %v110 = vld [vmem:[#allocation5 + $0x150] sm:$0xff]
    %v111 = vld [vmem:[#allocation5 + $0x158] sm:$0xff]
    %v112 = vld [vmem:[#allocation5 + $0x160] sm:$0xff]
    %v113 = vld [vmem:[#allocation5 + $0x168] sm:$0xff]
    %v114 = vld [vmem:[#allocation5 + $0x170] sm:$0xff]
    %v115 = vld [vmem:[#allocation5 + $0x178] sm:$0xff]
    %v116 = vld [vmem:[#allocation5 + $0x180] sm:$0xff]
    %v117 = vld [vmem:[#allocation5 + $0x188] sm:$0xff]
    %v118 = vld [vmem:[#allocation5 + $0x190] sm:$0xff]
    %v119 = vld [vmem:[#allocation5 + $0x198] sm:$0xff]
    %v120 = vld [vmem:[#allocation5 + $0x1a0] sm:$0xff]
    %v121 = vld [vmem:[#allocation5 + $0x1a8] sm:$0xff]
    %v122 = vld [vmem:[#allocation5 + $0x1b0] sm:$0xff]
    %v123 = vld [vmem:[#allocation5 + $0x1b8] sm:$0xff]
    %v124 = vld [vmem:[#allocation5 + $0x1c0] sm:$0xff]
    %v125 = vld [vmem:[#allocation5 + $0x1c8] sm:$0xff]
    %v126 = vld [vmem:[#allocation5 + $0x1d0] sm:$0xff]
    %v127 = vld [vmem:[#allocation5 + $0x1d8] sm:$0xff]
    %v128 = vld [vmem:[#allocation5 + $0x1e0] sm:$0xff]
    %v129 = vld [vmem:[#allocation5 + $0x1e8] sm:$0xff]
    %v130 = vld [vmem:[#allocation5 + $0x1f0] sm:$0xff]
    %v131 = vld [vmem:[#allocation5 + $0x1f8] sm:$0xff]
    %v132 = vld [vmem:[#allocation5 + $0x200] sm:$0xff]
    %v133 = vld [vmem:[#allocation5 + $0x208] sm:$0xff]
    %v134 = vld [vmem:[#allocation5 + $0x210] sm:$0xff]
    %v135 = vld [vmem:[#allocation5 + $0x218] sm:$0xff]
    %v136 = vld [vmem:[#allocation5 + $0x220] sm:$0xff]
    %v137 = vld [vmem:[#allocation5 + $0x228] sm:$0xff]
    %v138 = vld [vmem:[#allocation5 + $0x230] sm:$0xff]
    %v139 = vld [vmem:[#allocation5 + $0x238] sm:$0xff]
    %v140 = vld [vmem:[%s2] sm:$0x7]
    %v142 = vlaneseq
    %v143 = vshrl.u32 %v142, 7
    %v144 = vsub.s32 0, %v143
    %v145 = vrot.slane %v140, %v144
    %v146 = vlaneseq
    %v147 = vshrl.u32 %v146, 7
    %v148 = vsub.s32 1, %v147
    %v149 = vrot.slane %v140, %v148
    %v150 = vlaneseq
    %v151 = vshrl.u32 %v150, 7
    %v152 = vsub.s32 2, %v151
    %v153 = vrot.slane %v140, %v152
    %v159 = vunpack.c.l.s4 1983009808
    %v160 = vunpack.c.0.s8 %v159
    %v161 = vlaneseq
    %v162 = vshrl.u32 %v161, 7
    %v163 = vsub.s32 %v160, %v162
    %v164 = vrot.slane %v67, %v163
    %v165 = vcombine.high %v164, %v164
    %vm167 = vcmask 523264
    %v168 = vsel %vm167, %v165, 0
    %170 = vmatprep.subr.mxu0 %v114
    %171 = vmatpush1.msra.mxu0 %v113
    %172 = vmatprep.subr.mxu0 %v111
    %173 = vmatpush1.msra.mxu0 %v110
    %174 = vmatprep.subr.mxu0 %v108
    %175 = vmatpush1.msra.mxu0 %v107
    %176 = vmatprep.subr.mxu0 %v105
    %177 = vmatpush1.msra.mxu0 %v104
    %178 = vmatprep.subr.mxu0 %v102
    %179 = vmatpush1.msra.mxu0 %v101
    %180 = vmatprep.subr.mxu0 %v99
    %181 = vmatpush1.msra.mxu0 %v98
    %182 = vmatprep.subr.mxu0 %v96
    %183 = vmatpush1.msra.mxu0 %v95
    %184 = vmatprep.subr.mxu0 %v93
    %185 = vmatpush1.msra.mxu0 %v92
    %186 = vmatprep.subr.mxu0 %v90
    %187 = vmatpush1.msra.mxu0 %v89
    %188 = vmatprep.subr.mxu0 %v87
    %189 = vmatpush1.msra.mxu0 %v86
    %190 = vmatprep.subr.mxu0 %v84
    %191 = vmatpush1.msra.mxu0 %v83
    %192 = vmatprep.subr.mxu0 %v81
    %193 = vmatpush1.msra.mxu0 %v80
    %194 = vmatprep.subr.mxu0 %v78
    %195 = vmatpush1.msra.mxu0 %v77
    %196 = vmatprep.subr.mxu0 %v75
    %197 = vmatpush1.msra.mxu0 %v74
    %198 = vmatprep.subr.mxu0 %v72
    %199 = vmatpush1.msra.mxu0 %v71
    %200 = vmatprep.subr.mxu0 %v69
    %201 = vmatpush1.msra.mxu0 %v68
    %202 = vmatprep.subr.mxu0 0.0
    %203 = vmatpush2.msra.mxu0 0.0
    %204 = vmatprep.subr.mxu0 0.0
    %205 = vmatpush2.msra.mxu0 0.0
    %206 = vmatprep.subr.mxu0 0.0
    %207 = vmatpush2.msra.mxu0 0.0
    %208 = vmatprep.subr.mxu0 0.0
    %209 = vmatpush2.msra.mxu0 0.0
    %210 = vmatprep.subr.mxu0 0.0
    %211 = vmatpush2.msra.mxu0 0.0
    %212 = vmatprep.subr.mxu0 0.0
    %213 = vmatpush2.msra.mxu0 0.0
    %214 = vmatprep.subr.mxu0 0.0
    %215 = vmatpush2.msra.mxu0 0.0
    %216 = vmatprep.subr.mxu0 0.0
    %217 = vmatpush2.msra.mxu0 0.0
    %218 = vmatprep.subr.mxu0 %v138
    %219 = vmatpush2.msra.mxu0 %v137
    %220 = vmatprep.subr.mxu0 %v135
    %221 = vmatpush2.msra.mxu0 %v134
    %222 = vmatprep.subr.mxu0 %v132
    %223 = vmatpush2.msra.mxu0 %v131
    %224 = vmatprep.subr.mxu0 %v129
    %225 = vmatpush2.msra.mxu0 %v128
    %226 = vmatprep.subr.mxu0 %v126
    %227 = vmatpush2.msra.mxu0 %v125
    %228 = vmatprep.subr.mxu0 %v123
    %229 = vmatpush2.msra.mxu0 %v122
    %230 = vmatprep.subr.mxu0 %v120
    %231 = vmatpush2.msra.mxu0 %v119
    %232 = vmatprep.subr.mxu0 %v117
    %233 = vmatpush2.msra.mxu0 %v116
    %234 = vmatprep.mubr.f32.mxu0 %v168
    %235 = vmatmul.mubr.f32.gmra.mxu0 %v164
    %v236 = vpop.f32.mrf.mxu0
    %v237 = vadd.f32 %v145, %v236
    %v238 = vpop.f32.mrf.mxu0
    %v239 = vadd.f32 %v149, %v238
    %240 = vdwg.mxu0
    %241 = vmatprep.subr.mxu0 0.0
    %242 = vmatpush1.msra.mxu0 %v115
    %243 = vmatprep.subr.mxu0 0.0
    %244 = vmatpush1.msra.mxu0 %v112
    %245 = vmatprep.subr.mxu0 0.0
    %246 = vmatpush1.msra.mxu0 %v109
    %247 = vmatprep.subr.mxu0 0.0
    %248 = vmatpush1.msra.mxu0 %v106
    %249 = vmatprep.subr.mxu0 0.0
    %250 = vmatpush1.msra.mxu0 %v103
    %251 = vmatprep.subr.mxu0 0.0
    %252 = vmatpush1.msra.mxu0 %v100
    %253 = vmatprep.subr.mxu0 0.0
    %254 = vmatpush1.msra.mxu0 %v97
    %255 = vmatprep.subr.mxu0 0.0
    %256 = vmatpush1.msra.mxu0 %v94
    %257 = vmatprep.subr.mxu0 0.0
    %258 = vmatpush1.msra.mxu0 %v91
    %259 = vmatprep.subr.mxu0 0.0
    %260 = vmatpush1.msra.mxu0 %v88
    %261 = vmatprep.subr.mxu0 0.0
    %262 = vmatpush1.msra.mxu0 %v85
    %263 = vmatprep.subr.mxu0 0.0
    %264 = vmatpush1.msra.mxu0 %v82
    %265 = vmatprep.subr.mxu0 0.0
    %266 = vmatpush1.msra.mxu0 %v79
    %267 = vmatprep.subr.mxu0 0.0
    %268 = vmatpush1.msra.mxu0 %v76
    %269 = vmatprep.subr.mxu0 0.0
    %270 = vmatpush1.msra.mxu0 %v73
    %271 = vmatprep.subr.mxu0 0.0
    %272 = vmatpush1.msra.mxu0 %v70
    %273 = vmatprep.subr.mxu0 0.0
    %274 = vmatpush2.msra.mxu0 0.0
    %275 = vmatprep.subr.mxu0 0.0
    %276 = vmatpush2.msra.mxu0 0.0
    %277 = vmatprep.subr.mxu0 0.0
    %278 = vmatpush2.msra.mxu0 0.0
    %279 = vmatprep.subr.mxu0 0.0
    %280 = vmatpush2.msra.mxu0 0.0
    %281 = vmatprep.subr.mxu0 0.0
    %282 = vmatpush2.msra.mxu0 0.0
    %283 = vmatprep.subr.mxu0 0.0
    %284 = vmatpush2.msra.mxu0 0.0
    %285 = vmatprep.subr.mxu0 0.0
    %286 = vmatpush2.msra.mxu0 0.0
    %287 = vmatprep.subr.mxu0 0.0
    %288 = vmatpush2.msra.mxu0 0.0
    %289 = vmatprep.subr.mxu0 0.0
    %290 = vmatpush2.msra.mxu0 %v139
    %291 = vmatprep.subr.mxu0 0.0
    %292 = vmatpush2.msra.mxu0 %v136
    %293 = vmatprep.subr.mxu0 0.0
    %294 = vmatpush2.msra.mxu0 %v133
    %295 = vmatprep.subr.mxu0 0.0
    %296 = vmatpush2.msra.mxu0 %v130
    %297 = vmatprep.subr.mxu0 0.0
    %298 = vmatpush2.msra.mxu0 %v127
    %299 = vmatprep.subr.mxu0 0.0
    %300 = vmatpush2.msra.mxu0 %v124
    %301 = vmatprep.subr.mxu0 0.0
    %302 = vmatpush2.msra.mxu0 %v121
    %303 = vmatprep.subr.mxu0 0.0
    %304 = vmatpush2.msra.mxu0 %v118
    %305 = vmatprep.mubr.f32.mxu0 %v168
    %306 = vmatmul.mubr.f32.gmra.mxu0 %v164
    %v307 = vpop.f32.mrf.mxu0
    %v308 = vadd.f32 %v153, %v307
    %v309 = vpop.f32.mrf.mxu0
    %310 = vdwg.mxu0
    %v311 = vmax.f32 %v237, 0.0
    %v312 = vmax.f32 %v239, 0.0
    %v313 = vmax.f32 %v308, 0.0
    %v314 = vld [vmem:[#allocation7] sm:$0xff]
    %v315 = vld [vmem:[#allocation7 + $0x8] sm:$0xff]
    %v316 = vld [vmem:[#allocation7 + $0x10] sm:$0xff]
    %v317 = vld [vmem:[#allocation7 + $0x18] sm:$0xff]
    %v318 = vld [vmem:[#allocation7 + $0x20] sm:$0xff]
    %v319 = vld [vmem:[#allocation7 + $0x28] sm:$0xff]
    %v320 = vld [vmem:[#allocation7 + $0x30] sm:$0xff]
    %v321 = vld [vmem:[#allocation7 + $0x38] sm:$0xff]
    %v322 = vld [vmem:[#allocation7 + $0x40] sm:$0xff]
    %v323 = vld [vmem:[#allocation7 + $0x48] sm:$0xff]
    %v324 = vld [vmem:[#allocation7 + $0x50] sm:$0xff]
    %v325 = vld [vmem:[#allocation7 + $0x58] sm:$0xff]
    %v326 = vld [vmem:[#allocation7 + $0x60] sm:$0xff]
    %v327 = vld [vmem:[#allocation7 + $0x68] sm:$0xff]
    %v328 = vld [vmem:[#allocation7 + $0x70] sm:$0xff]
    %v329 = vld [vmem:[#allocation7 + $0x78] sm:$0xff]
    %v330 = vld [vmem:[#allocation7 + $0x80] sm:$0xff]
    %v331 = vld [vmem:[#allocation7 + $0x88] sm:$0xff]
    %v332 = vld [vmem:[#allocation7 + $0x90] sm:$0xff]
    %v333 = vld [vmem:[#allocation7 + $0x98] sm:$0xff]
    %v334 = vld [vmem:[#allocation7 + $0xa0] sm:$0xff]
    %v335 = vld [vmem:[#allocation7 + $0xa8] sm:$0xff]
    %v336 = vld [vmem:[#allocation7 + $0xb0] sm:$0xff]
    %v337 = vld [vmem:[#allocation7 + $0xb8] sm:$0xff]
    %v338 = vld [vmem:[#allocation7 + $0xc0] sm:$0xff]
    %v339 = vld [vmem:[#allocation7 + $0xc8] sm:$0xff]
    %v340 = vld [vmem:[#allocation7 + $0xd0] sm:$0xff]
    %v341 = vld [vmem:[#allocation7 + $0xd8] sm:$0xff]
    %v342 = vld [vmem:[#allocation7 + $0xe0] sm:$0xff]
    %v343 = vld [vmem:[#allocation7 + $0xe8] sm:$0xff]
    %v344 = vld [vmem:[#allocation7 + $0xf0] sm:$0xff]
    %v345 = vld [vmem:[#allocation7 + $0xf8] sm:$0xff]
    %v346 = vld [vmem:[#allocation7 + $0x100] sm:$0xff]
    %v347 = vld [vmem:[#allocation7 + $0x108] sm:$0xff]
    %v348 = vld [vmem:[#allocation7 + $0x110] sm:$0xff]
    %v349 = vld [vmem:[#allocation7 + $0x118] sm:$0xff]
    %v350 = vld [vmem:[#allocation7 + $0x120] sm:$0xff]
    %v351 = vld [vmem:[#allocation7 + $0x128] sm:$0xff]
    %v352 = vld [vmem:[#allocation7 + $0x130] sm:$0xff]
    %v353 = vld [vmem:[#allocation7 + $0x138] sm:$0xff]
    %v354 = vld [vmem:[#allocation7 + $0x140] sm:$0xff]
    %v355 = vld [vmem:[#allocation7 + $0x148] sm:$0xff]
    %v356 = vld [vmem:[#allocation7 + $0x150] sm:$0xff]
    %v357 = vld [vmem:[#allocation7 + $0x158] sm:$0xff]
    %v358 = vld [vmem:[#allocation7 + $0x160] sm:$0xff]
    %v359 = vld [vmem:[#allocation7 + $0x168] sm:$0xff]
    %v360 = vld [vmem:[#allocation7 + $0x170] sm:$0xff]
    %v361 = vld [vmem:[#allocation7 + $0x178] sm:$0xff]
    %v362 = vld [vmem:[#allocation7 + $0x180] sm:$0xff]
    %v363 = vld [vmem:[#allocation7 + $0x188] sm:$0xff]
    %v364 = vld [vmem:[#allocation7 + $0x190] sm:$0xff]
    %v365 = vld [vmem:[#allocation7 + $0x198] sm:$0xff]
    %v366 = vld [vmem:[#allocation7 + $0x1a0] sm:$0xff]
    %v367 = vld [vmem:[#allocation7 + $0x1a8] sm:$0xff]
    %v368 = vld [vmem:[#allocation7 + $0x1b0] sm:$0xff]
    %v369 = vld [vmem:[#allocation7 + $0x1b8] sm:$0xff]
    %v370 = vld [vmem:[#allocation7 + $0x1c0] sm:$0xff]
    %v371 = vld [vmem:[#allocation7 + $0x1c8] sm:$0xff]
    %v372 = vld [vmem:[#allocation7 + $0x1d0] sm:$0xff]
    %v373 = vld [vmem:[#allocation7 + $0x1d8] sm:$0xff]
    %v374 = vld [vmem:[#allocation7 + $0x1e0] sm:$0xff]
    %v375 = vld [vmem:[#allocation7 + $0x1e8] sm:$0xff]
    %v376 = vld [vmem:[#allocation7 + $0x1f0] sm:$0xff]
    %v377 = vld [vmem:[#allocation7 + $0x1f8] sm:$0xff]
    %v378 = vld [vmem:[#allocation7 + $0x200] sm:$0xff]
    %v379 = vld [vmem:[#allocation7 + $0x208] sm:$0xff]
    %v380 = vld [vmem:[#allocation7 + $0x210] sm:$0xff]
    %v381 = vld [vmem:[#allocation7 + $0x218] sm:$0xff]
    %v382 = vld [vmem:[#allocation7 + $0x220] sm:$0xff]
    %v383 = vld [vmem:[#allocation7 + $0x228] sm:$0xff]
    %v384 = vld [vmem:[#allocation7 + $0x230] sm:$0xff]
    %v385 = vld [vmem:[#allocation7 + $0x238] sm:$0xff]
    %v386 = vld [vmem:[%s4] sm:$0x3]
    %v388 = vlaneseq
    %v389 = vshrl.u32 %v388, 7
    %v390 = vsub.s32 0, %v389
    %v391 = vrot.slane %v386, %v390
    %v392 = vlaneseq
    %v393 = vshrl.u32 %v392, 7
    %v394 = vsub.s32 1, %v393
    %v395 = vrot.slane %v386, %v394
    %vm398 = vcmask 261120
    %v400 = vsel %vm398, %v313, 0
    %402 = vmatprep.subr.mxu0 %v345
    %403 = vmatpush1.msra.mxu0 %v344
    %404 = vmatprep.subr.mxu0 %v343
    %405 = vmatpush1.msra.mxu0 %v342
    %406 = vmatprep.subr.mxu0 %v341
    %407 = vmatpush1.msra.mxu0 %v340
    %408 = vmatprep.subr.mxu0 %v339
    %409 = vmatpush1.msra.mxu0 %v338
    %410 = vmatprep.subr.mxu0 %v337
    %411 = vmatpush1.msra.mxu0 %v336
    %412 = vmatprep.subr.mxu0 %v335
    %413 = vmatpush1.msra.mxu0 %v334
    %414 = vmatprep.subr.mxu0 %v333
    %415 = vmatpush1.msra.mxu0 %v332
    %416 = vmatprep.subr.mxu0 %v331
    %417 = vmatpush1.msra.mxu0 %v330
    %418 = vmatprep.subr.mxu0 %v329
    %419 = vmatpush1.msra.mxu0 %v328
    %420 = vmatprep.subr.mxu0 %v327
    %421 = vmatpush1.msra.mxu0 %v326
    %422 = vmatprep.subr.mxu0 %v325
    %423 = vmatpush1.msra.mxu0 %v324
    %424 = vmatprep.subr.mxu0 %v323
    %425 = vmatpush1.msra.mxu0 %v322
    %426 = vmatprep.subr.mxu0 %v321
    %427 = vmatpush1.msra.mxu0 %v320
    %428 = vmatprep.subr.mxu0 %v319
    %429 = vmatpush1.msra.mxu0 %v318
    %430 = vmatprep.subr.mxu0 %v317
    %431 = vmatpush1.msra.mxu0 %v316
    %432 = vmatprep.subr.mxu0 %v315
    %433 = vmatpush1.msra.mxu0 %v314
    %434 = vmatprep.subr.mxu0 %v377
    %435 = vmatpush2.msra.mxu0 %v376
    %436 = vmatprep.subr.mxu0 %v375
    %437 = vmatpush2.msra.mxu0 %v374
    %438 = vmatprep.subr.mxu0 %v373
    %439 = vmatpush2.msra.mxu0 %v372
    %440 = vmatprep.subr.mxu0 %v371
    %441 = vmatpush2.msra.mxu0 %v370
    %442 = vmatprep.subr.mxu0 %v369
    %443 = vmatpush2.msra.mxu0 %v368
    %444 = vmatprep.subr.mxu0 %v367
    %445 = vmatpush2.msra.mxu0 %v366
    %446 = vmatprep.subr.mxu0 %v365
    %447 = vmatpush2.msra.mxu0 %v364
    %448 = vmatprep.subr.mxu0 %v363
    %449 = vmatpush2.msra.mxu0 %v362
    %450 = vmatprep.subr.mxu0 %v361
    %451 = vmatpush2.msra.mxu0 %v360
    %452 = vmatprep.subr.mxu0 %v359
    %453 = vmatpush2.msra.mxu0 %v358
    %454 = vmatprep.subr.mxu0 %v357
    %455 = vmatpush2.msra.mxu0 %v356
    %456 = vmatprep.subr.mxu0 %v355
    %457 = vmatpush2.msra.mxu0 %v354
    %458 = vmatprep.subr.mxu0 %v353
    %459 = vmatpush2.msra.mxu0 %v352
    %460 = vmatprep.subr.mxu0 %v351
    %461 = vmatpush2.msra.mxu0 %v350
    %462 = vmatprep.subr.mxu0 %v349
    %463 = vmatpush2.msra.mxu0 %v348
    %464 = vmatprep.subr.mxu0 %v347
    %465 = vmatpush2.msra.mxu0 %v346
    %466 = vmatprep.mubr.f32.mxu0 %v312
    %467 = vmatmul.mubr.f32.gmra.mxu0 %v311
    %v468 = vpop.f32.mrf.mxu0
    %v469 = vadd.f32 %v391, %v468
    %v470 = vpop.f32.mrf.mxu0
    %v471 = vadd.f32 %v395, %v470
    %472 = vdwg.mxu0
    %473 = vmatprep.subr.mxu0 0.0
    %474 = vmatpush1.msra.mxu0 0.0
    %475 = vmatprep.subr.mxu0 0.0
    %476 = vmatpush1.msra.mxu0 0.0
    %477 = vmatprep.subr.mxu0 0.0
    %478 = vmatpush1.msra.mxu0 0.0
    %479 = vmatprep.subr.mxu0 0.0
    %480 = vmatpush1.msra.mxu0 0.0
    %481 = vmatprep.subr.mxu0 0.0
    %482 = vmatpush1.msra.mxu0 0.0
    %483 = vmatprep.subr.mxu0 0.0
    %484 = vmatpush1.msra.mxu0 0.0
    %485 = vmatprep.subr.mxu0 0.0
    %486 = vmatpush1.msra.mxu0 0.0
    %487 = vmatprep.subr.mxu0 0.0
    %488 = vmatpush1.msra.mxu0 0.0
    %489 = vmatprep.subr.mxu0 0.0
    %490 = vmatpush1.msra.mxu0 0.0
    %491 = vmatprep.subr.mxu0 0.0
    %492 = vmatpush1.msra.mxu0 0.0
    %493 = vmatprep.subr.mxu0 0.0
    %494 = vmatpush1.msra.mxu0 0.0
    %495 = vmatprep.subr.mxu0 0.0
    %496 = vmatpush1.msra.mxu0 0.0
    %497 = vmatprep.subr.mxu0 %v385
    %498 = vmatpush1.msra.mxu0 %v384
    %499 = vmatprep.subr.mxu0 %v383
    %500 = vmatpush1.msra.mxu0 %v382
    %501 = vmatprep.subr.mxu0 %v381
    %502 = vmatpush1.msra.mxu0 %v380
    %503 = vmatprep.subr.mxu0 %v379
    %504 = vmatpush1.msra.mxu0 %v378
    %505 = vmatprep.subr.mxu0 0.0
    %506 = vmatpush2.msra.mxu0 0.0
    %507 = vmatprep.subr.mxu0 0.0
    %508 = vmatpush2.msra.mxu0 0.0
    %509 = vmatprep.subr.mxu0 0.0
    %510 = vmatpush2.msra.mxu0 0.0
    %511 = vmatprep.subr.mxu0 0.0
    %512 = vmatpush2.msra.mxu0 0.0
    %513 = vmatprep.subr.mxu0 0.0
    %514 = vmatpush2.msra.mxu0 0.0
    %515 = vmatprep.subr.mxu0 0.0
    %516 = vmatpush2.msra.mxu0 0.0
    %517 = vmatprep.subr.mxu0 0.0
    %518 = vmatpush2.msra.mxu0 0.0
    %519 = vmatprep.subr.mxu0 0.0
    %520 = vmatpush2.msra.mxu0 0.0
    %521 = vmatprep.subr.mxu0 0.0
    %522 = vmatpush2.msra.mxu0 0.0
    %523 = vmatprep.subr.mxu0 0.0
    %524 = vmatpush2.msra.mxu0 0.0
    %525 = vmatprep.subr.mxu0 0.0
    %526 = vmatpush2.msra.mxu0 0.0
    %527 = vmatprep.subr.mxu0 0.0
    %528 = vmatpush2.msra.mxu0 0.0
    %529 = vmatprep.subr.mxu0 0.0
    %530 = vmatpush2.msra.mxu0 0.0
    %531 = vmatprep.subr.mxu0 0.0
    %532 = vmatpush2.msra.mxu0 0.0
    %533 = vmatprep.subr.mxu0 0.0
    %534 = vmatpush2.msra.mxu0 0.0
    %535 = vmatprep.subr.mxu0 0.0
    %536 = vmatpush2.msra.mxu0 0.0
    %537 = vmatprep.mubr.f32.mxu0 0.0
    %538 = vmatmul.mubr.f32.gmra.mxu0 %v400
    %v539 = vpop.f32.mrf.mxu0
    %v540 = vadd.f32 %v469, %v539
    %v541 = vpop.f32.mrf.mxu0
    %v542 = vadd.f32 %v471, %v541
    %543 = vdwg.mxu0
    %v544 = vmax.f32 %v540, 0.0
    %v545 = vmax.f32 %v542, 0.0
    %v546 = vld [vmem:[%s5] sm:$0x3]
    %v548 = vlaneseq
    %v549 = vshrl.u32 %v548, 7
    %v550 = vsub.s32 0, %v549
    %v551 = vrot.slane %v546, %v550
    %v552 = vlaneseq
    %v553 = vshrl.u32 %v552, 7
    %v554 = vsub.s32 1, %v553
    %v555 = vrot.slane %v546, %v554
    %v558 = vmul.f32 %v544, %v551
    %v559 = vmul.f32 %v545, %v555
    %vm560 = vcmask 1041408
    %v561 = vsel %vm560, %v558, 0.0
    %v562 = vsel %vm560, %v559, 0.0
    %v563 = vadd.f32 %v561, %v562
    %564 = vadd.xlane.f32.xlu0 %v563
    %v565 = vpop.xlane.xlu0 %564
    %v566 = vld [vmem:[#allocation2] sm:$0x1]
    %v568 = vlaneseq
    %v569 = vshrl.u32 %v568, 7
    %v570 = vsub.s32 0, %v569
    %v571 = vrot.slane %v566, %v570
    %v573 = vadd.f32 %v565, %v571
    %v574 = vmax.f32 %v573, 0.0
    %vm575 = vcmask 1024
    %576 = vst.msk [vmem:[%s7] sm:$0x3] %vm575, %v574
    // Predicated region
    $region42: #{tpu_custom_call.1} parent=1 // pred_check
      _
    $region43: #{tpu_custom_call.1} parent=1 // pred_check_branch
      %578 = sbr.rel (0) target = $region45
    $region44: #{tpu_custom_call.1} parent=1 // pred_region
      _
    $region45: #{tpu_custom_call.1} parent=1 // pred_fallthru
      _
    // Predicated region
    $region46: #{tpu_custom_call.1} parent=1 // pred_check
      _
    $region47: #{tpu_custom_call.1} parent=1 // pred_check_branch
      %580 = sbr.rel (0) target = $region49
    $region48: #{tpu_custom_call.1} parent=1 // pred_region
      _
    $region49: #{tpu_custom_call.1} parent=1 // pred_fallthru
      _
    %581 = vsyncpa [#allocation4], 1
    %582 = vsyncpa [#allocation6], 1

</llo_original>
